<compile_context>
chip_gen: v6e
topology: v6e:2x2x1
jax: 0.10.0
libtpu: 0.0.40
codegen_flags: <defaults>
</compile_context>

<pallas_src>
import functools

import jax
import jax.numpy as jnp
from jax.experimental import pallas as pl
from jax.experimental.pallas import tpu as pltpu


def _mlp_kernel(x_ref,
                w0, b0, w1, b1, w2, b2, w3, b3, w4, b4, w5, b5, w6, b6,
                o_ref):
    """Full MLP forward on one batch tile (batch on lanes).

    x_ref : (2, batch_tile)            -- input features on sublanes, batch on lanes
    wN    : (out_features, in_features) (PyTorch-native layout)
    bN    : (out_features, 1)
    o_ref : (7, batch_tile)
    """
    x = x_ref[...]
    h = jnp.tanh(jnp.dot(w0[...], x, preferred_element_type=jnp.float32) + b0[...])
    h = jnp.tanh(jnp.dot(w1[...], h, preferred_element_type=jnp.float32) + b1[...])
    h = jnp.tanh(jnp.dot(w2[...], h, preferred_element_type=jnp.float32) + b2[...])
    h = jnp.tanh(jnp.dot(w3[...], h, preferred_element_type=jnp.float32) + b3[...])
    h = jnp.tanh(jnp.dot(w4[...], h, preferred_element_type=jnp.float32) + b4[...])
    h = jnp.tanh(jnp.dot(w5[...], h, preferred_element_type=jnp.float32) + b5[...])
    out = jnp.dot(w6[...], h, preferred_element_type=jnp.float32) + b6[...]
    o_ref[...] = out.astype(o_ref.dtype)


def init_params(key, NN=32, dtype=jnp.float32):
    """Deterministic parameter init (PyTorch Linear-style uniform bounds).

    Weights are (out_features, in_features) — PyTorch-native layout.
    Biases are (out_features, 1).
    """
    dims = [2, NN, NN // 2, NN // 4, NN // 4, NN // 4, NN // 4, 7]
    params = []
    for i in range(len(dims) - 1):
        fan_in, fan_out = dims[i], dims[i + 1]
        key, kw, kb = jax.random.split(key, 3)
        bound = 1.0 / (fan_in ** 0.5)
        w = jax.random.uniform(kw, (fan_out, fan_in), dtype,
                               minval=-bound, maxval=bound)
        b = jax.random.uniform(kb, (fan_out, 1), dtype,
                               minval=-bound, maxval=bound)
        params.append((w, b))
    return params


@functools.partial(jax.jit, static_argnames=("batch_tile",))
def net_forward(x, params, batch_tile=512):
    """x: (B, 2) float32; returns (B, 7) float32.

    batch_tile must be a multiple of 128 (lane width); the batch is padded up
    to a multiple of batch_tile and the padding sliced off afterwards.
    """
    B, in_dim = x.shape
    assert in_dim == 2
    assert batch_tile % 128 == 0, "batch_tile must be a multiple of 128 lanes"
    out_dim = params[-1][0].shape[0]

    # Batch on lanes: pad B up to a multiple of batch_tile and transpose.
    grid_len = pl.cdiv(B, batch_tile)
    padded_B = grid_len * batch_tile
    xT = jnp.zeros((in_dim, padded_B), x.dtype).at[:, :B].set(x.T)

    # x / output tiled along the (lane) batch axis; feature axes full-height.
    x_spec = pl.BlockSpec((in_dim, batch_tile), lambda i: (0, i))
    o_spec = pl.BlockSpec((out_dim, batch_tile), lambda i: (0, i))

    # Weights & biases: full-array blocks, same block for every grid step
    # (VMEM-resident across the whole grid).
    param_specs = []
    flat_params = []
    for w, b in params:
        param_specs.append(pl.BlockSpec(w.shape, lambda i: (0, 0)))
        param_specs.append(pl.BlockSpec(b.shape, lambda i: (0, 0)))
        flat_params.extend([w, b])

    outT = pl.pallas_call(
        _mlp_kernel,
        out_shape=jax.ShapeDtypeStruct((out_dim, padded_B), x.dtype),
        grid_spec=pltpu.PrefetchScalarGridSpec(
            num_scalar_prefetch=0,
            grid=(grid_len,),
            in_specs=[x_spec] + param_specs,
            out_specs=o_spec,
        ),
        compiler_params=pltpu.CompilerParams(
            dimension_semantics=("parallel",),
        ),
    )(xT, *flat_params)

    # Drop batch padding and return (B, 7) row-major like the PyTorch module.
    return outT[:, :B].T


def net_forward_ref(x, params):
    """Pure-JAX reference for correctness checking (x @ W.T + b, PyTorch-style)."""
    h = x
    for i, (w, b) in enumerate(params):
        h = h @ w.T + b[:, 0]
        if i < len(params) - 1:
            h = jnp.tanh(h)
    return h


if __name__ == "__main__":
    NN = 32          # hidden width (NN/2 = 16, NN/4 = 8)
    B = 16           # batch (number of (x, t)-style 2-D input points)

    key = jax.random.PRNGKey(0)
    key, kx = jax.random.split(key)
    x = jax.random.normal(kx, (B, 2), dtype=jnp.float32)

    params = init_params(jax.random.PRNGKey(0), NN=NN)

    out = net_forward(x, params, batch_tile=512)
    out = jax.block_until_ready(out)

    ref = net_forward_ref(x, params)
    assert out.shape == (B, 7), out.shape
    assert jnp.allclose(out, ref, atol=1e-4, rtol=1e-4), "mismatch vs reference"

    print("KERNEL_OK")
</pallas_src>

<mosaic_0001>
module attributes {stable_mosaic.version = 11 : i64} {
  func.func @_mlp_kernel(%arg0: i32, %arg1: memref<2x512xf32, #tpu.memory_space<vmem>>, %arg2: memref<32x2xf32, #tpu.memory_space<vmem>>, %arg3: memref<32x1xf32, #tpu.memory_space<vmem>>, %arg4: memref<16x32xf32, #tpu.memory_space<vmem>>, %arg5: memref<16x1xf32, #tpu.memory_space<vmem>>, %arg6: memref<8x16xf32, #tpu.memory_space<vmem>>, %arg7: memref<8x1xf32, #tpu.memory_space<vmem>>, %arg8: memref<8x8xf32, #tpu.memory_space<vmem>>, %arg9: memref<8x1xf32, #tpu.memory_space<vmem>>, %arg10: memref<8x8xf32, #tpu.memory_space<vmem>>, %arg11: memref<8x1xf32, #tpu.memory_space<vmem>>, %arg12: memref<8x8xf32, #tpu.memory_space<vmem>>, %arg13: memref<8x1xf32, #tpu.memory_space<vmem>>, %arg14: memref<7x8xf32, #tpu.memory_space<vmem>>, %arg15: memref<7x1xf32, #tpu.memory_space<vmem>>, %arg16: memref<7x512xf32, #tpu.memory_space<vmem>>) attributes {dimension_semantics = [#tpu.dimension_semantics<parallel>], iteration_bounds = array<i64: 1>, scalar_prefetch = 0 : i64, scratch_operands = 0 : i64, tpu.core_type = #tpu.core_type<tc>, window_params = [{transform_indices = @transform_0, window_bounds = array<i64: 2, 512>}, {pipeline_mode = #tpu.pipeline_mode<synchronous>, transform_indices = @transform_1, window_bounds = array<i64: 32, 2>}, {pipeline_mode = #tpu.pipeline_mode<synchronous>, transform_indices = @transform_2, window_bounds = array<i64: 32, 1>}, {pipeline_mode = #tpu.pipeline_mode<synchronous>, transform_indices = @transform_3, window_bounds = array<i64: 16, 32>}, {pipeline_mode = #tpu.pipeline_mode<synchronous>, transform_indices = @transform_4, window_bounds = array<i64: 16, 1>}, {pipeline_mode = #tpu.pipeline_mode<synchronous>, transform_indices = @transform_5, window_bounds = array<i64: 8, 16>}, {pipeline_mode = #tpu.pipeline_mode<synchronous>, transform_indices = @transform_6, window_bounds = array<i64: 8, 1>}, {pipeline_mode = #tpu.pipeline_mode<synchronous>, transform_indices = @transform_7, window_bounds = array<i64: 8, 8>}, {pipeline_mode = #tpu.pipeline_mode<synchronous>, transform_indices = @transform_8, window_bounds = array<i64: 8, 1>}, {pipeline_mode = #tpu.pipeline_mode<synchronous>, transform_indices = @transform_9, window_bounds = array<i64: 8, 8>}, {pipeline_mode = #tpu.pipeline_mode<synchronous>, transform_indices = @transform_10, window_bounds = array<i64: 8, 1>}, {pipeline_mode = #tpu.pipeline_mode<synchronous>, transform_indices = @transform_11, window_bounds = array<i64: 8, 8>}, {pipeline_mode = #tpu.pipeline_mode<synchronous>, transform_indices = @transform_12, window_bounds = array<i64: 8, 1>}, {pipeline_mode = #tpu.pipeline_mode<synchronous>, transform_indices = @transform_13, window_bounds = array<i64: 7, 8>}, {pipeline_mode = #tpu.pipeline_mode<synchronous>, transform_indices = @transform_14, window_bounds = array<i64: 7, 1>}, {transform_indices = @transform_15, window_bounds = array<i64: 7, 512>}]} {
    %c0 = arith.constant 0 : index
    %c0_0 = arith.constant 0 : index
    %0 = vector.load %arg1[%c0, %c0_0] : memref<2x512xf32, #tpu.memory_space<vmem>>, vector<2x512xf32>
    %c0_1 = arith.constant 0 : index
    %c0_2 = arith.constant 0 : index
    %1 = vector.load %arg2[%c0_1, %c0_2] : memref<32x2xf32, #tpu.memory_space<vmem>>, vector<32x2xf32>
    %cst = arith.constant dense<0.000000e+00> : vector<32x512xf32>
    %2 = tpu.matmul %1, %0, %cst {dimension_numbers = #tpu.dot_dimension_numbers<[1], [0], [0], [1], [0, 0, 1, 1], [], []>} : vector<32x2xf32>, vector<2x512xf32>, vector<32x512xf32> -> vector<32x512xf32>
    %c0_3 = arith.constant 0 : index
    %c0_4 = arith.constant 0 : index
    %3 = vector.load %arg3[%c0_3, %c0_4] : memref<32x1xf32, #tpu.memory_space<vmem>>, vector<32x1xf32>
    %4 = vector.broadcast %3 : vector<32x1xf32> to vector<32x512xf32>
    %5 = arith.addf %2, %4 : vector<32x512xf32>
    %6 = math.tanh %5 : vector<32x512xf32>
    %c0_5 = arith.constant 0 : index
    %c0_6 = arith.constant 0 : index
    %7 = vector.load %arg4[%c0_5, %c0_6] : memref<16x32xf32, #tpu.memory_space<vmem>>, vector<16x32xf32>
    %cst_7 = arith.constant dense<0.000000e+00> : vector<16x512xf32>
    %8 = tpu.matmul %7, %6, %cst_7 {dimension_numbers = #tpu.dot_dimension_numbers<[1], [0], [0], [1], [0, 0, 1, 1], [], []>} : vector<16x32xf32>, vector<32x512xf32>, vector<16x512xf32> -> vector<16x512xf32>
    %c0_8 = arith.constant 0 : index
    %c0_9 = arith.constant 0 : index
    %9 = vector.load %arg5[%c0_8, %c0_9] : memref<16x1xf32, #tpu.memory_space<vmem>>, vector<16x1xf32>
    %10 = vector.broadcast %9 : vector<16x1xf32> to vector<16x512xf32>
    %11 = arith.addf %8, %10 : vector<16x512xf32>
    %12 = math.tanh %11 : vector<16x512xf32>
    %c0_10 = arith.constant 0 : index
    %c0_11 = arith.constant 0 : index
    %13 = vector.load %arg6[%c0_10, %c0_11] : memref<8x16xf32, #tpu.memory_space<vmem>>, vector<8x16xf32>
    %cst_12 = arith.constant dense<0.000000e+00> : vector<8x512xf32>
    %14 = tpu.matmul %13, %12, %cst_12 {dimension_numbers = #tpu.dot_dimension_numbers<[1], [0], [0], [1], [0, 0, 1, 1], [], []>} : vector<8x16xf32>, vector<16x512xf32>, vector<8x512xf32> -> vector<8x512xf32>
    %c0_13 = arith.constant 0 : index
    %c0_14 = arith.constant 0 : index
    %15 = vector.load %arg7[%c0_13, %c0_14] : memref<8x1xf32, #tpu.memory_space<vmem>>, vector<8x1xf32>
    %16 = vector.broadcast %15 : vector<8x1xf32> to vector<8x512xf32>
    %17 = arith.addf %14, %16 : vector<8x512xf32>
    %18 = math.tanh %17 : vector<8x512xf32>
    %c0_15 = arith.constant 0 : index
    %c0_16 = arith.constant 0 : index
    %19 = vector.load %arg8[%c0_15, %c0_16] : memref<8x8xf32, #tpu.memory_space<vmem>>, vector<8x8xf32>
    %cst_17 = arith.constant dense<0.000000e+00> : vector<8x512xf32>
    %20 = tpu.matmul %19, %18, %cst_17 {dimension_numbers = #tpu.dot_dimension_numbers<[1], [0], [0], [1], [0, 0, 1, 1], [], []>} : vector<8x8xf32>, vector<8x512xf32>, vector<8x512xf32> -> vector<8x512xf32>
    %c0_18 = arith.constant 0 : index
    %c0_19 = arith.constant 0 : index
    %21 = vector.load %arg9[%c0_18, %c0_19] : memref<8x1xf32, #tpu.memory_space<vmem>>, vector<8x1xf32>
    %22 = vector.broadcast %21 : vector<8x1xf32> to vector<8x512xf32>
    %23 = arith.addf %20, %22 : vector<8x512xf32>
    %24 = math.tanh %23 : vector<8x512xf32>
    %c0_20 = arith.constant 0 : index
    %c0_21 = arith.constant 0 : index
    %25 = vector.load %arg10[%c0_20, %c0_21] : memref<8x8xf32, #tpu.memory_space<vmem>>, vector<8x8xf32>
    %cst_22 = arith.constant dense<0.000000e+00> : vector<8x512xf32>
    %26 = tpu.matmul %25, %24, %cst_22 {dimension_numbers = #tpu.dot_dimension_numbers<[1], [0], [0], [1], [0, 0, 1, 1], [], []>} : vector<8x8xf32>, vector<8x512xf32>, vector<8x512xf32> -> vector<8x512xf32>
    %c0_23 = arith.constant 0 : index
    %c0_24 = arith.constant 0 : index
    %27 = vector.load %arg11[%c0_23, %c0_24] : memref<8x1xf32, #tpu.memory_space<vmem>>, vector<8x1xf32>
    %28 = vector.broadcast %27 : vector<8x1xf32> to vector<8x512xf32>
    %29 = arith.addf %26, %28 : vector<8x512xf32>
    %30 = math.tanh %29 : vector<8x512xf32>
    %c0_25 = arith.constant 0 : index
    %c0_26 = arith.constant 0 : index
    %31 = vector.load %arg12[%c0_25, %c0_26] : memref<8x8xf32, #tpu.memory_space<vmem>>, vector<8x8xf32>
    %cst_27 = arith.constant dense<0.000000e+00> : vector<8x512xf32>
    %32 = tpu.matmul %31, %30, %cst_27 {dimension_numbers = #tpu.dot_dimension_numbers<[1], [0], [0], [1], [0, 0, 1, 1], [], []>} : vector<8x8xf32>, vector<8x512xf32>, vector<8x512xf32> -> vector<8x512xf32>
    %c0_28 = arith.constant 0 : index
    %c0_29 = arith.constant 0 : index
    %33 = vector.load %arg13[%c0_28, %c0_29] : memref<8x1xf32, #tpu.memory_space<vmem>>, vector<8x1xf32>
    %34 = vector.broadcast %33 : vector<8x1xf32> to vector<8x512xf32>
    %35 = arith.addf %32, %34 : vector<8x512xf32>
    %36 = math.tanh %35 : vector<8x512xf32>
    %c0_30 = arith.constant 0 : index
    %c0_31 = arith.constant 0 : index
    %37 = vector.load %arg14[%c0_30, %c0_31] : memref<7x8xf32, #tpu.memory_space<vmem>>, vector<7x8xf32>
    %cst_32 = arith.constant dense<0.000000e+00> : vector<7x512xf32>
    %38 = tpu.matmul %37, %36, %cst_32 {dimension_numbers = #tpu.dot_dimension_numbers<[1], [0], [0], [1], [0, 0, 1, 1], [], []>} : vector<7x8xf32>, vector<8x512xf32>, vector<7x512xf32> -> vector<7x512xf32>
    %c0_33 = arith.constant 0 : index
    %c0_34 = arith.constant 0 : index
    %39 = vector.load %arg15[%c0_33, %c0_34] : memref<7x1xf32, #tpu.memory_space<vmem>>, vector<7x1xf32>
    %40 = vector.broadcast %39 : vector<7x1xf32> to vector<7x512xf32>
    %41 = arith.addf %38, %40 : vector<7x512xf32>
    %c0_35 = arith.constant 0 : index
    %c0_36 = arith.constant 0 : index
    %42 = vector.load %arg16[%c0_35, %c0_36] : memref<7x512xf32, #tpu.memory_space<vmem>>, vector<7x512xf32>
    tpu.vector_store %arg16[%c0_35, %c0_36], %41 {strides = array<i32>} : memref<7x512xf32, #tpu.memory_space<vmem>>, vector<7x512xf32>,
    return
  }
  func.func @transform_0(%arg0: i32) -> (i32, i32) {
    %c0_i32 = arith.constant 0 : i32
    %c0_i32_0 = arith.constant 0 : i32
    return %c0_i32, %arg0 : i32, i32
  }
  func.func @transform_1(%arg0: i32) -> (i32, i32) {
    %c0_i32 = arith.constant 0 : i32
    %c0_i32_0 = arith.constant 0 : i32
    %c0_i32_1 = arith.constant 0 : i32
    return %c0_i32, %c0_i32_0 : i32, i32
  }
  func.func @transform_2(%arg0: i32) -> (i32, i32) {
    %c0_i32 = arith.constant 0 : i32
    %c0_i32_0 = arith.constant 0 : i32
    %c0_i32_1 = arith.constant 0 : i32
    return %c0_i32, %c0_i32_0 : i32, i32
  }
  func.func @transform_3(%arg0: i32) -> (i32, i32) {
    %c0_i32 = arith.constant 0 : i32
    %c0_i32_0 = arith.constant 0 : i32
    %c0_i32_1 = arith.constant 0 : i32
    return %c0_i32, %c0_i32_0 : i32, i32
  }
  func.func @transform_4(%arg0: i32) -> (i32, i32) {
    %c0_i32 = arith.constant 0 : i32
    %c0_i32_0 = arith.constant 0 : i32
    %c0_i32_1 = arith.constant 0 : i32
    return %c0_i32, %c0_i32_0 : i32, i32
  }
  func.func @transform_5(%arg0: i32) -> (i32, i32) {
    %c0_i32 = arith.constant 0 : i32
    %c0_i32_0 = arith.constant 0 : i32
    %c0_i32_1 = arith.constant 0 : i32
    return %c0_i32, %c0_i32_0 : i32, i32
  }
  func.func @transform_6(%arg0: i32) -> (i32, i32) {
    %c0_i32 = arith.constant 0 : i32
    %c0_i32_0 = arith.constant 0 : i32
    %c0_i32_1 = arith.constant 0 : i32
    return %c0_i32, %c0_i32_0 : i32, i32
  }
  func.func @transform_7(%arg0: i32) -> (i32, i32) {
    %c0_i32 = arith.constant 0 : i32
    %c0_i32_0 = arith.constant 0 : i32
    %c0_i32_1 = arith.constant 0 : i32
    return %c0_i32, %c0_i32_0 : i32, i32
  }
  func.func @transform_8(%arg0: i32) -> (i32, i32) {
    %c0_i32 = arith.constant 0 : i32
    %c0_i32_0 = arith.constant 0 : i32
    %c0_i32_1 = arith.constant 0 : i32
    return %c0_i32, %c0_i32_0 : i32, i32
  }
  func.func @transform_9(%arg0: i32) -> (i32, i32) {
    %c0_i32 = arith.constant 0 : i32
    %c0_i32_0 = arith.constant 0 : i32
    %c0_i32_1 = arith.constant 0 : i32
    return %c0_i32, %c0_i32_0 : i32, i32
  }
  func.func @transform_10(%arg0: i32) -> (i32, i32) {
    %c0_i32 = arith.constant 0 : i32
    %c0_i32_0 = arith.constant 0 : i32
    %c0_i32_1 = arith.constant 0 : i32
    return %c0_i32, %c0_i32_0 : i32, i32
  }
  func.func @transform_11(%arg0: i32) -> (i32, i32) {
    %c0_i32 = arith.constant 0 : i32
    %c0_i32_0 = arith.constant 0 : i32
    %c0_i32_1 = arith.constant 0 : i32
    return %c0_i32, %c0_i32_0 : i32, i32
  }
  func.func @transform_12(%arg0: i32) -> (i32, i32) {
    %c0_i32 = arith.constant 0 : i32
    %c0_i32_0 = arith.constant 0 : i32
    %c0_i32_1 = arith.constant 0 : i32
    return %c0_i32, %c0_i32_0 : i32, i32
  }
  func.func @transform_13(%arg0: i32) -> (i32, i32) {
    %c0_i32 = arith.constant 0 : i32
    %c0_i32_0 = arith.constant 0 : i32
    %c0_i32_1 = arith.constant 0 : i32
    return %c0_i32, %c0_i32_0 : i32, i32
  }
  func.func @transform_14(%arg0: i32) -> (i32, i32) {
    %c0_i32 = arith.constant 0 : i32
    %c0_i32_0 = arith.constant 0 : i32
    %c0_i32_1 = arith.constant 0 : i32
    return %c0_i32, %c0_i32_0 : i32, i32
  }
  func.func @transform_15(%arg0: i32) -> (i32, i32) {
    %c0_i32 = arith.constant 0 : i32
    %c0_i32_0 = arith.constant 0 : i32
    return %c0_i32, %arg0 : i32, i32
  }
}

</mosaic_0001>

<llo_original>
// kernel: net_forward.1
$region0: #{net_forward.1}
  #allocation0 [shape = 'u32[]', space=smem, size = 0x4, offset = 0x4, fixed_abs, tag = 'smem constant byte address 0x4 - core index']
  #allocation1 [shape = 'u32[144,128]{1,0:T(1,128)}', space=vmem, size = 0x12000, scoped, tag = 'internal scratch']
  %s0 = inlined_call_operand.vmem [shape: f32[2,512], index: 0, kind: input, shape index: {}]
  %s1 = inlined_call_operand.vmem [shape: f32[32,2], index: 1, kind: input, shape index: {}]
  %s2 = inlined_call_operand.vmem [shape: f32[32,1], index: 2, kind: input, shape index: {}]
  %s3 = inlined_call_operand.vmem [shape: f32[16,32], index: 3, kind: input, shape index: {}]
  %s4 = inlined_call_operand.vmem [shape: f32[16,1], index: 4, kind: input, shape index: {}]
  %s5 = inlined_call_operand.vmem [shape: f32[8,16], index: 5, kind: input, shape index: {}]
  %s6 = inlined_call_operand.vmem [shape: f32[8,1], index: 6, kind: input, shape index: {}]
  %s7 = inlined_call_operand.vmem [shape: f32[8,8], index: 7, kind: input, shape index: {}]
  %s8 = inlined_call_operand.vmem [shape: f32[8,1], index: 8, kind: input, shape index: {}]
  %s9 = inlined_call_operand.vmem [shape: f32[8,8], index: 9, kind: input, shape index: {}]
  %s10 = inlined_call_operand.vmem [shape: f32[8,1], index: 10, kind: input, shape index: {}]
  %s11 = inlined_call_operand.vmem [shape: f32[8,8], index: 11, kind: input, shape index: {}]
  %s12 = inlined_call_operand.vmem [shape: f32[8,1], index: 12, kind: input, shape index: {}]
  %s13 = inlined_call_operand.vmem [shape: f32[7,8], index: 13, kind: input, shape index: {}]
  %s14 = inlined_call_operand.vmem [shape: f32[7,1], index: 14, kind: input, shape index: {}]
  %s15 = inlined_call_operand.vmem [shape: f32[7,512], index: 15, kind: output, shape index: {}]
  %s16 = sld [smem:[#allocation0]]
  $region70: #{net_forward.1} parent=0
    _
  %s18 = ssub.s32 1, %s16
  %s19 = scalar_select 0, %s18, %s16
  // Predicated region
  $region2: #{net_forward.1} parent=0 // pred_check
    _
  $region3: #{net_forward.1} parent=0 // pred_check_branch
    %21 = sbr.rel (0) target = $region5
  $region4: #{net_forward.1} parent=0 // pred_region
    _
  $region5: #{net_forward.1} parent=0 // pred_fallthru
    _
  // Predicated region
  $region6: #{net_forward.1} parent=0 // pred_check
    _
  $region7: #{net_forward.1} parent=0 // pred_check_branch
    %23 = sbr.rel (0) target = $region9
  $region8: #{net_forward.1} parent=0 // pred_region
    _
  $region9: #{net_forward.1} parent=0 // pred_fallthru
    _
  // Predicated region
  $region10: #{net_forward.1} parent=0 // pred_check
    _
  $region11: #{net_forward.1} parent=0 // pred_check_branch
    %25 = sbr.rel (0) target = $region13
  $region12: #{net_forward.1} parent=0 // pred_region
    _
  $region13: #{net_forward.1} parent=0 // pred_fallthru
    _
  // Predicated region
  $region14: #{net_forward.1} parent=0 // pred_check
    _
  $region15: #{net_forward.1} parent=0 // pred_check_branch
    %27 = sbr.rel (0) target = $region17
  $region16: #{net_forward.1} parent=0 // pred_region
    _
  $region17: #{net_forward.1} parent=0 // pred_fallthru
    _
  // Predicated region
  $region18: #{net_forward.1} parent=0 // pred_check
    _
  $region19: #{net_forward.1} parent=0 // pred_check_branch
    %29 = sbr.rel (0) target = $region21
  $region20: #{net_forward.1} parent=0 // pred_region
    _
  $region21: #{net_forward.1} parent=0 // pred_fallthru
    _
  // Predicated region
  $region22: #{net_forward.1} parent=0 // pred_check
    _
  $region23: #{net_forward.1} parent=0 // pred_check_branch
    %31 = sbr.rel (0) target = $region25
  $region24: #{net_forward.1} parent=0 // pred_region
    _
  $region25: #{net_forward.1} parent=0 // pred_fallthru
    _
  // Predicated region
  $region26: #{net_forward.1} parent=0 // pred_check
    _
  $region27: #{net_forward.1} parent=0 // pred_check_branch
    %33 = sbr.rel (0) target = $region29
  $region28: #{net_forward.1} parent=0 // pred_region
    _
  $region29: #{net_forward.1} parent=0 // pred_fallthru
    _
  // Predicated region
  $region30: #{net_forward.1} parent=0 // pred_check
    _
  $region31: #{net_forward.1} parent=0 // pred_check_branch
    %35 = sbr.rel (0) target = $region33
  $region32: #{net_forward.1} parent=0 // pred_region
    _
  $region33: #{net_forward.1} parent=0 // pred_fallthru
    _
  // Predicated region
  $region34: #{net_forward.1} parent=0 // pred_check
    _
  $region35: #{net_forward.1} parent=0 // pred_check_branch
    %37 = sbr.rel (0) target = $region37
  $region36: #{net_forward.1} parent=0 // pred_region
    _
  $region37: #{net_forward.1} parent=0 // pred_fallthru
    _
  // Predicated region
  $region38: #{net_forward.1} parent=0 // pred_check
    _
  $region39: #{net_forward.1} parent=0 // pred_check_branch
    %39 = sbr.rel (0) target = $region41
  $region40: #{net_forward.1} parent=0 // pred_region
    _
  $region41: #{net_forward.1} parent=0 // pred_fallthru
    _
  // Predicated region
  $region42: #{net_forward.1} parent=0 // pred_check
    _
  $region43: #{net_forward.1} parent=0 // pred_check_branch
    %41 = sbr.rel (0) target = $region45
  $region44: #{net_forward.1} parent=0 // pred_region
    _
  $region45: #{net_forward.1} parent=0 // pred_fallthru
    _
  // Predicated region
  $region46: #{net_forward.1} parent=0 // pred_check
    _
  $region47: #{net_forward.1} parent=0 // pred_check_branch
    %43 = sbr.rel (0) target = $region49
  $region48: #{net_forward.1} parent=0 // pred_region
    _
  $region49: #{net_forward.1} parent=0 // pred_fallthru
    _
  // Predicated region
  $region50: #{net_forward.1} parent=0 // pred_check
    _
  $region51: #{net_forward.1} parent=0 // pred_check_branch
    %45 = sbr.rel (0) target = $region53
  $region52: #{net_forward.1} parent=0 // pred_region
    _
  $region53: #{net_forward.1} parent=0 // pred_fallthru
    _
  // Predicated region
  $region54: #{net_forward.1} parent=0 // pred_check
    _
  $region55: #{net_forward.1} parent=0 // pred_check_branch
    %47 = sbr.rel (0) target = $region57
  $region56: #{net_forward.1} parent=0 // pred_region
    _
  $region57: #{net_forward.1} parent=0 // pred_fallthru
    _
  // Predicated region
  $region58: #{net_forward.1} parent=0 // pred_check
    _
  $region59: #{net_forward.1} parent=0 // pred_check_branch
    %49 = sbr.rel (0) target = $region61
  $region60: #{net_forward.1} parent=0 // pred_region
    _
  $region61: #{net_forward.1} parent=0 // pred_fallthru
    _
  %v50 = vld [vmem:[%s0] sm:$0xff]
  %v51 = vld [vmem:[%s1] sm:$0xff]
  %v52 = vld [vmem:[%s1 + $0x8] sm:$0xff]
  %v53 = vld [vmem:[%s1 + $0x10] sm:$0xff]
  %v54 = vld [vmem:[%s1 + $0x18] sm:$0xff]
  %v55 = vld [vmem:[%s2] sm:$0xff]
  %v56 = vld [vmem:[%s2 + $0x8] sm:$0xff]
  %v57 = vld [vmem:[%s2 + $0x10] sm:$0xff]
  %v58 = vld [vmem:[%s2 + $0x18] sm:$0xff]
  %60 = vset.pattern.permute.xlu0 0
  %61 = vperm.xlu0 %60, %v55
  %v62 = vpop.permute.xlu0 %61
  %65 = vset.pattern.permute.xlu0 0
  %66 = vperm.xlu0 %65, %v56
  %v67 = vpop.permute.xlu0 %66
  %70 = vset.pattern.permute.xlu0 0
  %71 = vperm.xlu0 %70, %v57
  %v72 = vpop.permute.xlu0 %71
  %75 = vset.pattern.permute.xlu0 0
  %76 = vperm.xlu0 %75, %v58
  %v77 = vpop.permute.xlu0 %76
  %v80 = vcombine.high %v50, %v50
  %v82 = vunpack.c.l.s4 1983009808
  %v83 = vunpack.c.0.s8 %v82
  %v84 = vlaneseq
  %v85 = vshrl.u32 %v84, 7
  %v86 = vsub.s32 %v83, %v85
  %v87 = vrot.slane %v50, %v86
  %v89 = vunpack.c.l.s4 1983009808
  %v90 = vunpack.c.0.s8 %v89
  %v91 = vlaneseq
  %v92 = vshrl.u32 %v91, 7
  %v93 = vsub.s32 %v90, %v92
  %v94 = vrot.slane %v80, %v93
  %v95 = vcombine.high %v87, %v87
  %v96 = vcombine.high %v94, %v94
  %vm97 = vcmask 15360
  %v99 = vsel %vm97, %v51, 0
  %v102 = vsel %vm97, %v52, 0
  %v105 = vsel %vm97, %v53, 0
  %v108 = vsel %vm97, %v54, 0
  %vm110 = vcmask 1041408
  %v111 = vsel %vm110, %v87, 0
  %v113 = vsel %vm110, %v95, 0
  %v115 = vsel %vm110, %v94, 0
  %v117 = vsel %vm110, %v96, 0
  %119 = vmatprep.subr.mxu0 0.0
  %120 = vmatpush1.msra.mxu0 0.0
  %121 = vmatprep.subr.mxu0 0.0
  %122 = vmatpush1.msra.mxu0 0.0
  %123 = vmatprep.subr.mxu0 0.0
  %124 = vmatpush1.msra.mxu0 0.0
  %125 = vmatprep.subr.mxu0 0.0
  %126 = vmatpush1.msra.mxu0 0.0
  %127 = vmatprep.subr.mxu0 0.0
  %128 = vmatpush1.msra.mxu0 0.0
  %129 = vmatprep.subr.mxu0 0.0
  %130 = vmatpush1.msra.mxu0 0.0
  %131 = vmatprep.subr.mxu0 0.0
  %132 = vmatpush1.msra.mxu0 0.0
  %133 = vmatprep.subr.mxu0 0.0
  %134 = vmatpush1.msra.mxu0 0.0
  %135 = vmatprep.subr.mxu0 0.0
  %136 = vmatpush1.msra.mxu0 0.0
  %137 = vmatprep.subr.mxu0 0.0
  %138 = vmatpush1.msra.mxu0 0.0
  %139 = vmatprep.subr.mxu0 0.0
  %140 = vmatpush1.msra.mxu0 0.0
  %141 = vmatprep.subr.mxu0 0.0
  %142 = vmatpush1.msra.mxu0 0.0
  %143 = vmatprep.subr.mxu0 0.0
  %144 = vmatpush1.msra.mxu0 0.0
  %145 = vmatprep.subr.mxu0 0.0
  %146 = vmatpush1.msra.mxu0 0.0
  %147 = vmatprep.subr.mxu0 0.0
  %148 = vmatpush1.msra.mxu0 0.0
  %149 = vmatprep.subr.mxu0 %v113
  %150 = vmatpush1.msra.mxu0 %v111
  %151 = vmatprep.subr.mxu0 0.0
  %152 = vmatpush2.msra.mxu0 0.0
  %153 = vmatprep.subr.mxu0 0.0
  %154 = vmatpush2.msra.mxu0 0.0
  %155 = vmatprep.subr.mxu0 0.0
  %156 = vmatpush2.msra.mxu0 0.0
  %157 = vmatprep.subr.mxu0 0.0
  %158 = vmatpush2.msra.mxu0 0.0
  %159 = vmatprep.subr.mxu0 0.0
  %160 = vmatpush2.msra.mxu0 0.0
  %161 = vmatprep.subr.mxu0 0.0
  %162 = vmatpush2.msra.mxu0 0.0
  %163 = vmatprep.subr.mxu0 0.0
  %164 = vmatpush2.msra.mxu0 0.0
  %165 = vmatprep.subr.mxu0 0.0
  %166 = vmatpush2.msra.mxu0 0.0
  %167 = vmatprep.subr.mxu0 0.0
  %168 = vmatpush2.msra.mxu0 0.0
  %169 = vmatprep.subr.mxu0 0.0
  %170 = vmatpush2.msra.mxu0 0.0
  %171 = vmatprep.subr.mxu0 0.0
  %172 = vmatpush2.msra.mxu0 0.0
  %173 = vmatprep.subr.mxu0 0.0
  %174 = vmatpush2.msra.mxu0 0.0
  %175 = vmatprep.subr.mxu0 0.0
  %176 = vmatpush2.msra.mxu0 0.0
  %177 = vmatprep.subr.mxu0 0.0
  %178 = vmatpush2.msra.mxu0 0.0
  %179 = vmatprep.subr.mxu0 0.0
  %180 = vmatpush2.msra.mxu0 0.0
  %181 = vmatprep.subr.mxu0 0.0
  %182 = vmatpush2.msra.mxu0 0.0
  %183 = vmatprep.mubr.f32.mxu0 0.0
  %184 = vmatmul.mubr.f32.gmra.mxu0 %v99
  %v185 = vpop.f32.mrf.mxu0
  %v186 = vadd.f32 %v62, %v185
  %v187 = vpop.f32.mrf.mxu0
  %v188 = vadd.f32 %v62, %v187
  %189 = vmatprep.mubr.f32.mxu0 0.0
  %190 = vmatmul.mubr.f32.gmra.mxu0 %v102
  %v191 = vpop.f32.mrf.mxu0
  %v192 = vadd.f32 %v67, %v191
  %v193 = vpop.f32.mrf.mxu0
  %v194 = vadd.f32 %v67, %v193
  %195 = vmatprep.mubr.f32.mxu0 0.0
  %196 = vmatmul.mubr.f32.gmra.mxu0 %v105
  %v197 = vpop.f32.mrf.mxu0
  %v198 = vadd.f32 %v72, %v197
  %v199 = vpop.f32.mrf.mxu0
  %v200 = vadd.f32 %v72, %v199
  %201 = vmatprep.mubr.f32.mxu0 0.0
  %202 = vmatmul.mubr.f32.gmra.mxu0 %v108
  %v203 = vpop.f32.mrf.mxu0
  %v204 = vadd.f32 %v77, %v203
  %v205 = vpop.f32.mrf.mxu0
  %v206 = vadd.f32 %v77, %v205
  %207 = vdwg.mxu0
  %208 = vmatprep.subr.mxu0 0.0
  %209 = vmatpush1.msra.mxu0 0.0
  %210 = vmatprep.subr.mxu0 0.0
  %211 = vmatpush1.msra.mxu0 0.0
  %212 = vmatprep.subr.mxu0 0.0
  %213 = vmatpush1.msra.mxu0 0.0
  %214 = vmatprep.subr.mxu0 0.0
  %215 = vmatpush1.msra.mxu0 0.0
  %216 = vmatprep.subr.mxu0 0.0
  %217 = vmatpush1.msra.mxu0 0.0
  %218 = vmatprep.subr.mxu0 0.0
  %219 = vmatpush1.msra.mxu0 0.0
  %220 = vmatprep.subr.mxu0 0.0
  %221 = vmatpush1.msra.mxu0 0.0
  %222 = vmatprep.subr.mxu0 0.0
  %223 = vmatpush1.msra.mxu0 0.0
  %224 = vmatprep.subr.mxu0 0.0
  %225 = vmatpush1.msra.mxu0 0.0
  %226 = vmatprep.subr.mxu0 0.0
  %227 = vmatpush1.msra.mxu0 0.0
  %228 = vmatprep.subr.mxu0 0.0
  %229 = vmatpush1.msra.mxu0 0.0
  %230 = vmatprep.subr.mxu0 0.0
  %231 = vmatpush1.msra.mxu0 0.0
  %232 = vmatprep.subr.mxu0 0.0
  %233 = vmatpush1.msra.mxu0 0.0
  %234 = vmatprep.subr.mxu0 0.0
  %235 = vmatpush1.msra.mxu0 0.0
  %236 = vmatprep.subr.mxu0 0.0
  %237 = vmatpush1.msra.mxu0 0.0
  %238 = vmatprep.subr.mxu0 %v117
  %239 = vmatpush1.msra.mxu0 %v115
  %240 = vmatprep.subr.mxu0 0.0
  %241 = vmatpush2.msra.mxu0 0.0
  %242 = vmatprep.subr.mxu0 0.0
  %243 = vmatpush2.msra.mxu0 0.0
  %244 = vmatprep.subr.mxu0 0.0
  %245 = vmatpush2.msra.mxu0 0.0
  %246 = vmatprep.subr.mxu0 0.0
  %247 = vmatpush2.msra.mxu0 0.0
  %248 = vmatprep.subr.mxu0 0.0
  %249 = vmatpush2.msra.mxu0 0.0
  %250 = vmatprep.subr.mxu0 0.0
  %251 = vmatpush2.msra.mxu0 0.0
  %252 = vmatprep.subr.mxu0 0.0
  %253 = vmatpush2.msra.mxu0 0.0
  %254 = vmatprep.subr.mxu0 0.0
  %255 = vmatpush2.msra.mxu0 0.0
  %256 = vmatprep.subr.mxu0 0.0
  %257 = vmatpush2.msra.mxu0 0.0
  %258 = vmatprep.subr.mxu0 0.0
  %259 = vmatpush2.msra.mxu0 0.0
  %260 = vmatprep.subr.mxu0 0.0
  %261 = vmatpush2.msra.mxu0 0.0
  %262 = vmatprep.subr.mxu0 0.0
  %263 = vmatpush2.msra.mxu0 0.0
  %264 = vmatprep.subr.mxu0 0.0
  %265 = vmatpush2.msra.mxu0 0.0
  %266 = vmatprep.subr.mxu0 0.0
  %267 = vmatpush2.msra.mxu0 0.0
  %268 = vmatprep.subr.mxu0 0.0
  %269 = vmatpush2.msra.mxu0 0.0
  %270 = vmatprep.subr.mxu0 0.0
  %271 = vmatpush2.msra.mxu0 0.0
  %272 = vmatprep.mubr.f32.mxu0 0.0
  %273 = vmatmul.mubr.f32.gmra.mxu0 %v99
  %v274 = vpop.f32.mrf.mxu0
  %v275 = vadd.f32 %v62, %v274
  %v276 = vpop.f32.mrf.mxu0
  %v277 = vadd.f32 %v62, %v276
  %278 = vmatprep.mubr.f32.mxu0 0.0
  %279 = vmatmul.mubr.f32.gmra.mxu0 %v102
  %v280 = vpop.f32.mrf.mxu0
  %v281 = vadd.f32 %v67, %v280
  %v282 = vpop.f32.mrf.mxu0
  %v283 = vadd.f32 %v67, %v282
  %284 = vmatprep.mubr.f32.mxu0 0.0
  %285 = vmatmul.mubr.f32.gmra.mxu0 %v105
  %v286 = vpop.f32.mrf.mxu0
  %v287 = vadd.f32 %v72, %v286
  %v288 = vpop.f32.mrf.mxu0
  %v289 = vadd.f32 %v72, %v288
  %290 = vmatprep.mubr.f32.mxu0 0.0
  %291 = vmatmul.mubr.f32.gmra.mxu0 %v108
  %v292 = vpop.f32.mrf.mxu0
  %v293 = vadd.f32 %v77, %v292
  %v294 = vpop.f32.mrf.mxu0
  %v295 = vadd.f32 %v77, %v294
  %296 = vdwg.mxu0
  %v297 = vtanh.pop %v186
  %v298 = vtanh.pop %v188
  %v299 = vtanh.pop %v275
  %v300 = vtanh.pop %v277
  %v301 = vtanh.pop %v192
  %v302 = vtanh.pop %v194
  %v303 = vtanh.pop %v281
  %v304 = vtanh.pop %v283
  %v305 = vtanh.pop %v198
  %v306 = vtanh.pop %v200
  %v307 = vtanh.pop %v287
  %v308 = vtanh.pop %v289
  %v309 = vtanh.pop %v204
  %v310 = vtanh.pop %v206
  %v311 = vtanh.pop %v293
  %v312 = vtanh.pop %v295
  %v313 = vld [vmem:[%s3] sm:$0xff]
  %v314 = vld [vmem:[%s3 + $0x8] sm:$0xff]
  %v315 = vld [vmem:[%s4] sm:$0xff]
  %v316 = vld [vmem:[%s4 + $0x8] sm:$0xff]
  %318 = vset.pattern.permute.xlu0 0
  %319 = vperm.xlu0 %318, %v315
  %v320 = vpop.permute.xlu0 %319
  %323 = vset.pattern.permute.xlu0 0
  %324 = vperm.xlu0 %323, %v316
  %v325 = vpop.permute.xlu0 %324
  %vm327 = vcmask 261120
  %v329 = vsel %vm327, %v313, 0
  %v332 = vsel %vm327, %v314, 0
  %334 = vmatprep.subr.mxu0 0.0
  %335 = vmatpush1.msra.mxu0 0.0
  %336 = vmatprep.subr.mxu0 0.0
  %337 = vmatpush1.msra.mxu0 0.0
  %338 = vmatprep.subr.mxu0 0.0
  %339 = vmatpush1.msra.mxu0 0.0
  %340 = vmatprep.subr.mxu0 0.0
  %341 = vmatpush1.msra.mxu0 0.0
  %342 = vmatprep.subr.mxu0 0.0
  %343 = vmatpush1.msra.mxu0 0.0
  %344 = vmatprep.subr.mxu0 0.0
  %345 = vmatpush1.msra.mxu0 0.0
  %346 = vmatprep.subr.mxu0 0.0
  %347 = vmatpush1.msra.mxu0 0.0
  %348 = vmatprep.subr.mxu0 0.0
  %349 = vmatpush1.msra.mxu0 0.0
  %350 = vmatprep.subr.mxu0 0.0
  %351 = vmatpush1.msra.mxu0 0.0
  %352 = vmatprep.subr.mxu0 0.0
  %353 = vmatpush1.msra.mxu0 0.0
  %354 = vmatprep.subr.mxu0 0.0
  %355 = vmatpush1.msra.mxu0 0.0
  %356 = vmatprep.subr.mxu0 0.0
  %357 = vmatpush1.msra.mxu0 0.0
  %358 = vmatprep.subr.mxu0 %v310
  %359 = vmatpush1.msra.mxu0 %v309
  %360 = vmatprep.subr.mxu0 %v306
  %361 = vmatpush1.msra.mxu0 %v305
  %362 = vmatprep.subr.mxu0 %v302
  %363 = vmatpush1.msra.mxu0 %v301
  %364 = vmatprep.subr.mxu0 %v298
  %365 = vmatpush1.msra.mxu0 %v297
  %366 = vmatprep.subr.mxu0 0.0
  %367 = vmatpush2.msra.mxu0 0.0
  %368 = vmatprep.subr.mxu0 0.0
  %369 = vmatpush2.msra.mxu0 0.0
  %370 = vmatprep.subr.mxu0 0.0
  %371 = vmatpush2.msra.mxu0 0.0
  %372 = vmatprep.subr.mxu0 0.0
  %373 = vmatpush2.msra.mxu0 0.0
  %374 = vmatprep.subr.mxu0 0.0
  %375 = vmatpush2.msra.mxu0 0.0
  %376 = vmatprep.subr.mxu0 0.0
  %377 = vmatpush2.msra.mxu0 0.0
  %378 = vmatprep.subr.mxu0 0.0
  %379 = vmatpush2.msra.mxu0 0.0
  %380 = vmatprep.subr.mxu0 0.0
  %381 = vmatpush2.msra.mxu0 0.0
  %382 = vmatprep.subr.mxu0 0.0
  %383 = vmatpush2.msra.mxu0 0.0
  %384 = vmatprep.subr.mxu0 0.0
  %385 = vmatpush2.msra.mxu0 0.0
  %386 = vmatprep.subr.mxu0 0.0
  %387 = vmatpush2.msra.mxu0 0.0
  %388 = vmatprep.subr.mxu0 0.0
  %389 = vmatpush2.msra.mxu0 0.0
  %390 = vmatprep.subr.mxu0 0.0
  %391 = vmatpush2.msra.mxu0 0.0
  %392 = vmatprep.subr.mxu0 0.0
  %393 = vmatpush2.msra.mxu0 0.0
  %394 = vmatprep.subr.mxu0 0.0
  %395 = vmatpush2.msra.mxu0 0.0
  %396 = vmatprep.subr.mxu0 0.0
  %397 = vmatpush2.msra.mxu0 0.0
  %398 = vmatprep.mubr.f32.mxu0 0.0
  %399 = vmatmul.mubr.f32.gmra.mxu0 %v329
  %v400 = vpop.f32.mrf.mxu0
  %v401 = vadd.f32 %v320, %v400
  %v402 = vpop.f32.mrf.mxu0
  %v403 = vadd.f32 %v320, %v402
  %404 = vmatprep.mubr.f32.mxu0 0.0
  %405 = vmatmul.mubr.f32.gmra.mxu0 %v332
  %v406 = vpop.f32.mrf.mxu0
  %v407 = vadd.f32 %v325, %v406
  %v408 = vpop.f32.mrf.mxu0
  %v409 = vadd.f32 %v325, %v408
  %410 = vdwg.mxu0
  %411 = vmatprep.subr.mxu0 0.0
  %412 = vmatpush1.msra.mxu0 0.0
  %413 = vmatprep.subr.mxu0 0.0
  %414 = vmatpush1.msra.mxu0 0.0
  %415 = vmatprep.subr.mxu0 0.0
  %416 = vmatpush1.msra.mxu0 0.0
  %417 = vmatprep.subr.mxu0 0.0
  %418 = vmatpush1.msra.mxu0 0.0
  %419 = vmatprep.subr.mxu0 0.0
  %420 = vmatpush1.msra.mxu0 0.0
  %421 = vmatprep.subr.mxu0 0.0
  %422 = vmatpush1.msra.mxu0 0.0
  %423 = vmatprep.subr.mxu0 0.0
  %424 = vmatpush1.msra.mxu0 0.0
  %425 = vmatprep.subr.mxu0 0.0
  %426 = vmatpush1.msra.mxu0 0.0
  %427 = vmatprep.subr.mxu0 0.0
  %428 = vmatpush1.msra.mxu0 0.0
  %429 = vmatprep.subr.mxu0 0.0
  %430 = vmatpush1.msra.mxu0 0.0
  %431 = vmatprep.subr.mxu0 0.0
  %432 = vmatpush1.msra.mxu0 0.0
  %433 = vmatprep.subr.mxu0 0.0
  %434 = vmatpush1.msra.mxu0 0.0
  %435 = vmatprep.subr.mxu0 %v312
  %436 = vmatpush1.msra.mxu0 %v311
  %437 = vmatprep.subr.mxu0 %v308
  %438 = vmatpush1.msra.mxu0 %v307
  %439 = vmatprep.subr.mxu0 %v304
  %440 = vmatpush1.msra.mxu0 %v303
  %441 = vmatprep.subr.mxu0 %v300
  %442 = vmatpush1.msra.mxu0 %v299
  %443 = vmatprep.subr.mxu0 0.0
  %444 = vmatpush2.msra.mxu0 0.0
  %445 = vmatprep.subr.mxu0 0.0
  %446 = vmatpush2.msra.mxu0 0.0
  %447 = vmatprep.subr.mxu0 0.0
  %448 = vmatpush2.msra.mxu0 0.0
  %449 = vmatprep.subr.mxu0 0.0
  %450 = vmatpush2.msra.mxu0 0.0
  %451 = vmatprep.subr.mxu0 0.0
  %452 = vmatpush2.msra.mxu0 0.0
  %453 = vmatprep.subr.mxu0 0.0
  %454 = vmatpush2.msra.mxu0 0.0
  %455 = vmatprep.subr.mxu0 0.0
  %456 = vmatpush2.msra.mxu0 0.0
  %457 = vmatprep.subr.mxu0 0.0
  %458 = vmatpush2.msra.mxu0 0.0
  %459 = vmatprep.subr.mxu0 0.0
  %460 = vmatpush2.msra.mxu0 0.0
  %461 = vmatprep.subr.mxu0 0.0
  %462 = vmatpush2.msra.mxu0 0.0
  %463 = vmatprep.subr.mxu0 0.0
  %464 = vmatpush2.msra.mxu0 0.0
  %465 = vmatprep.subr.mxu0 0.0
  %466 = vmatpush2.msra.mxu0 0.0
  %467 = vmatprep.subr.mxu0 0.0
  %468 = vmatpush2.msra.mxu0 0.0
  %469 = vmatprep.subr.mxu0 0.0
  %470 = vmatpush2.msra.mxu0 0.0
  %471 = vmatprep.subr.mxu0 0.0
  %472 = vmatpush2.msra.mxu0 0.0
  %473 = vmatprep.subr.mxu0 0.0
  %474 = vmatpush2.msra.mxu0 0.0
  %475 = vmatprep.mubr.f32.mxu0 0.0
  %476 = vmatmul.mubr.f32.gmra.mxu0 %v329
  %v477 = vpop.f32.mrf.mxu0
  %v478 = vadd.f32 %v320, %v477
  %v479 = vpop.f32.mrf.mxu0
  %v480 = vadd.f32 %v320, %v479
  %481 = vmatprep.mubr.f32.mxu0 0.0
  %482 = vmatmul.mubr.f32.gmra.mxu0 %v332
  %v483 = vpop.f32.mrf.mxu0
  %v484 = vadd.f32 %v325, %v483
  %v485 = vpop.f32.mrf.mxu0
  %v486 = vadd.f32 %v325, %v485
  %487 = vdwg.mxu0
  %v488 = vtanh.pop %v401
  %v489 = vtanh.pop %v403
  %v490 = vtanh.pop %v478
  %v491 = vtanh.pop %v480
  %v492 = vtanh.pop %v407
  %v493 = vtanh.pop %v409
  %v494 = vtanh.pop %v484
  %v495 = vtanh.pop %v486
  %v496 = vld [vmem:[%s5] sm:$0xff]
  %v497 = vld [vmem:[%s6] sm:$0xff]
  %499 = vset.pattern.permute.xlu0 0
  %500 = vperm.xlu0 %499, %v497
  %v501 = vpop.permute.xlu0 %500
  %vm503 = vcmask 130048
  %v505 = vsel %vm503, %v496, 0
  %507 = vmatprep.subr.mxu0 0.0
  %508 = vmatpush1.msra.mxu0 0.0
  %509 = vmatprep.subr.mxu0 0.0
  %510 = vmatpush1.msra.mxu0 0.0
  %511 = vmatprep.subr.mxu0 0.0
  %512 = vmatpush1.msra.mxu0 0.0
  %513 = vmatprep.subr.mxu0 0.0
  %514 = vmatpush1.msra.mxu0 0.0
  %515 = vmatprep.subr.mxu0 0.0
  %516 = vmatpush1.msra.mxu0 0.0
  %517 = vmatprep.subr.mxu0 0.0
  %518 = vmatpush1.msra.mxu0 0.0
  %519 = vmatprep.subr.mxu0 0.0
  %520 = vmatpush1.msra.mxu0 0.0
  %521 = vmatprep.subr.mxu0 0.0
  %522 = vmatpush1.msra.mxu0 0.0
  %523 = vmatprep.subr.mxu0 0.0
  %524 = vmatpush1.msra.mxu0 0.0
  %525 = vmatprep.subr.mxu0 0.0
  %526 = vmatpush1.msra.mxu0 0.0
  %527 = vmatprep.subr.mxu0 0.0
  %528 = vmatpush1.msra.mxu0 0.0
  %529 = vmatprep.subr.mxu0 0.0
  %530 = vmatpush1.msra.mxu0 0.0
  %531 = vmatprep.subr.mxu0 0.0
  %532 = vmatpush1.msra.mxu0 0.0
  %533 = vmatprep.subr.mxu0 0.0
  %534 = vmatpush1.msra.mxu0 0.0
  %535 = vmatprep.subr.mxu0 %v493
  %536 = vmatpush1.msra.mxu0 %v492
  %537 = vmatprep.subr.mxu0 %v489
  %538 = vmatpush1.msra.mxu0 %v488
  %539 = vmatprep.subr.mxu0 0.0
  %540 = vmatpush2.msra.mxu0 0.0
  %541 = vmatprep.subr.mxu0 0.0
  %542 = vmatpush2.msra.mxu0 0.0
  %543 = vmatprep.subr.mxu0 0.0
  %544 = vmatpush2.msra.mxu0 0.0
  %545 = vmatprep.subr.mxu0 0.0
  %546 = vmatpush2.msra.mxu0 0.0
  %547 = vmatprep.subr.mxu0 0.0
  %548 = vmatpush2.msra.mxu0 0.0
  %549 = vmatprep.subr.mxu0 0.0
  %550 = vmatpush2.msra.mxu0 0.0
  %551 = vmatprep.subr.mxu0 0.0
  %552 = vmatpush2.msra.mxu0 0.0
  %553 = vmatprep.subr.mxu0 0.0
  %554 = vmatpush2.msra.mxu0 0.0
  %555 = vmatprep.subr.mxu0 0.0
  %556 = vmatpush2.msra.mxu0 0.0
  %557 = vmatprep.subr.mxu0 0.0
  %558 = vmatpush2.msra.mxu0 0.0
  %559 = vmatprep.subr.mxu0 0.0
  %560 = vmatpush2.msra.mxu0 0.0
  %561 = vmatprep.subr.mxu0 0.0
  %562 = vmatpush2.msra.mxu0 0.0
  %563 = vmatprep.subr.mxu0 0.0
  %564 = vmatpush2.msra.mxu0 0.0
  %565 = vmatprep.subr.mxu0 0.0
  %566 = vmatpush2.msra.mxu0 0.0
  %567 = vmatprep.subr.mxu0 0.0
  %568 = vmatpush2.msra.mxu0 0.0
  %569 = vmatprep.subr.mxu0 0.0
  %570 = vmatpush2.msra.mxu0 0.0
  %571 = vmatprep.mubr.f32.mxu0 0.0
  %572 = vmatmul.mubr.f32.gmra.mxu0 %v505
  %v573 = vpop.f32.mrf.mxu0
  %v574 = vadd.f32 %v501, %v573
  %v575 = vpop.f32.mrf.mxu0
  %v576 = vadd.f32 %v501, %v575
  %577 = vdwg.mxu0
  %578 = vmatprep.subr.mxu0 0.0
  %579 = vmatpush1.msra.mxu0 0.0
  %580 = vmatprep.subr.mxu0 0.0
  %581 = vmatpush1.msra.mxu0 0.0
  %582 = vmatprep.subr.mxu0 0.0
  %583 = vmatpush1.msra.mxu0 0.0
  %584 = vmatprep.subr.mxu0 0.0
  %585 = vmatpush1.msra.mxu0 0.0
  %586 = vmatprep.subr.mxu0 0.0
  %587 = vmatpush1.msra.mxu0 0.0
  %588 = vmatprep.subr.mxu0 0.0
  %589 = vmatpush1.msra.mxu0 0.0
  %590 = vmatprep.subr.mxu0 0.0
  %591 = vmatpush1.msra.mxu0 0.0
  %592 = vmatprep.subr.mxu0 0.0
  %593 = vmatpush1.msra.mxu0 0.0
  %594 = vmatprep.subr.mxu0 0.0
  %595 = vmatpush1.msra.mxu0 0.0
  %596 = vmatprep.subr.mxu0 0.0
  %597 = vmatpush1.msra.mxu0 0.0
  %598 = vmatprep.subr.mxu0 0.0
  %599 = vmatpush1.msra.mxu0 0.0
  %600 = vmatprep.subr.mxu0 0.0
  %601 = vmatpush1.msra.mxu0 0.0
  %602 = vmatprep.subr.mxu0 0.0
  %603 = vmatpush1.msra.mxu0 0.0
  %604 = vmatprep.subr.mxu0 0.0
  %605 = vmatpush1.msra.mxu0 0.0
  %606 = vmatprep.subr.mxu0 %v495
  %607 = vmatpush1.msra.mxu0 %v494
  %608 = vmatprep.subr.mxu0 %v491
  %609 = vmatpush1.msra.mxu0 %v490
  %610 = vmatprep.subr.mxu0 0.0
  %611 = vmatpush2.msra.mxu0 0.0
  %612 = vmatprep.subr.mxu0 0.0
  %613 = vmatpush2.msra.mxu0 0.0
  %614 = vmatprep.subr.mxu0 0.0
  %615 = vmatpush2.msra.mxu0 0.0
  %616 = vmatprep.subr.mxu0 0.0
  %617 = vmatpush2.msra.mxu0 0.0
  %618 = vmatprep.subr.mxu0 0.0
  %619 = vmatpush2.msra.mxu0 0.0
  %620 = vmatprep.subr.mxu0 0.0
  %621 = vmatpush2.msra.mxu0 0.0
  %622 = vmatprep.subr.mxu0 0.0
  %623 = vmatpush2.msra.mxu0 0.0
  %624 = vmatprep.subr.mxu0 0.0
  %625 = vmatpush2.msra.mxu0 0.0
  %626 = vmatprep.subr.mxu0 0.0
  %627 = vmatpush2.msra.mxu0 0.0
  %628 = vmatprep.subr.mxu0 0.0
  %629 = vmatpush2.msra.mxu0 0.0
  %630 = vmatprep.subr.mxu0 0.0
  %631 = vmatpush2.msra.mxu0 0.0
  %632 = vmatprep.subr.mxu0 0.0
  %633 = vmatpush2.msra.mxu0 0.0
  %634 = vmatprep.subr.mxu0 0.0
  %635 = vmatpush2.msra.mxu0 0.0
  %636 = vmatprep.subr.mxu0 0.0
  %637 = vmatpush2.msra.mxu0 0.0
  %638 = vmatprep.subr.mxu0 0.0
  %639 = vmatpush2.msra.mxu0 0.0
  %640 = vmatprep.subr.mxu0 0.0
  %641 = vmatpush2.msra.mxu0 0.0
  %642 = vmatprep.mubr.f32.mxu0 0.0
  %643 = vmatmul.mubr.f32.gmra.mxu0 %v505
  %v644 = vpop.f32.mrf.mxu0
  %v645 = vadd.f32 %v501, %v644
  %v646 = vpop.f32.mrf.mxu0
  %v647 = vadd.f32 %v501, %v646
  %648 = vdwg.mxu0
  %v649 = vtanh.pop %v574
  %v650 = vtanh.pop %v576
  %v651 = vtanh.pop %v645
  %v652 = vtanh.pop %v647
  %v653 = vld [vmem:[%s7] sm:$0xff]
  %v654 = vld [vmem:[%s8] sm:$0xff]
  %656 = vset.pattern.permute.xlu0 0
  %657 = vperm.xlu0 %656, %v654
  %v658 = vpop.permute.xlu0 %657
  %vm660 = vcmask 64512
  %v662 = vsel %vm660, %v653, 0
  %664 = vmatprep.subr.mxu0 0.0
  %665 = vmatpush1.msra.mxu0 0.0
  %666 = vmatprep.subr.mxu0 0.0
  %667 = vmatpush1.msra.mxu0 0.0
  %668 = vmatprep.subr.mxu0 0.0
  %669 = vmatpush1.msra.mxu0 0.0
  %670 = vmatprep.subr.mxu0 0.0
  %671 = vmatpush1.msra.mxu0 0.0
  %672 = vmatprep.subr.mxu0 0.0
  %673 = vmatpush1.msra.mxu0 0.0
  %674 = vmatprep.subr.mxu0 0.0
  %675 = vmatpush1.msra.mxu0 0.0
  %676 = vmatprep.subr.mxu0 0.0
  %677 = vmatpush1.msra.mxu0 0.0
  %678 = vmatprep.subr.mxu0 0.0
  %679 = vmatpush1.msra.mxu0 0.0
  %680 = vmatprep.subr.mxu0 0.0
  %681 = vmatpush1.msra.mxu0 0.0
  %682 = vmatprep.subr.mxu0 0.0
  %683 = vmatpush1.msra.mxu0 0.0
  %684 = vmatprep.subr.mxu0 0.0
  %685 = vmatpush1.msra.mxu0 0.0
  %686 = vmatprep.subr.mxu0 0.0
  %687 = vmatpush1.msra.mxu0 0.0
  %688 = vmatprep.subr.mxu0 0.0
  %689 = vmatpush1.msra.mxu0 0.0
  %690 = vmatprep.subr.mxu0 0.0
  %691 = vmatpush1.msra.mxu0 0.0
  %692 = vmatprep.subr.mxu0 0.0
  %693 = vmatpush1.msra.mxu0 0.0
  %694 = vmatprep.subr.mxu0 %v650
  %695 = vmatpush1.msra.mxu0 %v649
  %696 = vmatprep.subr.mxu0 0.0
  %697 = vmatpush2.msra.mxu0 0.0
  %698 = vmatprep.subr.mxu0 0.0
  %699 = vmatpush2.msra.mxu0 0.0
  %700 = vmatprep.subr.mxu0 0.0
  %701 = vmatpush2.msra.mxu0 0.0
  %702 = vmatprep.subr.mxu0 0.0
  %703 = vmatpush2.msra.mxu0 0.0
  %704 = vmatprep.subr.mxu0 0.0
  %705 = vmatpush2.msra.mxu0 0.0
  %706 = vmatprep.subr.mxu0 0.0
  %707 = vmatpush2.msra.mxu0 0.0
  %708 = vmatprep.subr.mxu0 0.0
  %709 = vmatpush2.msra.mxu0 0.0
  %710 = vmatprep.subr.mxu0 0.0
  %711 = vmatpush2.msra.mxu0 0.0
  %712 = vmatprep.subr.mxu0 0.0
  %713 = vmatpush2.msra.mxu0 0.0
  %714 = vmatprep.subr.mxu0 0.0
  %715 = vmatpush2.msra.mxu0 0.0
  %716 = vmatprep.subr.mxu0 0.0
  %717 = vmatpush2.msra.mxu0 0.0
  %718 = vmatprep.subr.mxu0 0.0
  %719 = vmatpush2.msra.mxu0 0.0
  %720 = vmatprep.subr.mxu0 0.0
  %721 = vmatpush2.msra.mxu0 0.0
  %722 = vmatprep.subr.mxu0 0.0
  %723 = vmatpush2.msra.mxu0 0.0
  %724 = vmatprep.subr.mxu0 0.0
  %725 = vmatpush2.msra.mxu0 0.0
  %726 = vmatprep.subr.mxu0 0.0
  %727 = vmatpush2.msra.mxu0 0.0
  %728 = vmatprep.mubr.f32.mxu0 0.0
  %729 = vmatmul.mubr.f32.gmra.mxu0 %v662
  %v730 = vpop.f32.mrf.mxu0
  %v731 = vadd.f32 %v658, %v730
  %v732 = vpop.f32.mrf.mxu0
  %v733 = vadd.f32 %v658, %v732
  %734 = vdwg.mxu0
  %735 = vmatprep.subr.mxu0 0.0
  %736 = vmatpush1.msra.mxu0 0.0
  %737 = vmatprep.subr.mxu0 0.0
  %738 = vmatpush1.msra.mxu0 0.0
  %739 = vmatprep.subr.mxu0 0.0
  %740 = vmatpush1.msra.mxu0 0.0
  %741 = vmatprep.subr.mxu0 0.0
  %742 = vmatpush1.msra.mxu0 0.0
  %743 = vmatprep.subr.mxu0 0.0
  %744 = vmatpush1.msra.mxu0 0.0
  %745 = vmatprep.subr.mxu0 0.0
  %746 = vmatpush1.msra.mxu0 0.0
  %747 = vmatprep.subr.mxu0 0.0
  %748 = vmatpush1.msra.mxu0 0.0
  %749 = vmatprep.subr.mxu0 0.0
  %750 = vmatpush1.msra.mxu0 0.0
  %751 = vmatprep.subr.mxu0 0.0
  %752 = vmatpush1.msra.mxu0 0.0
  %753 = vmatprep.subr.mxu0 0.0
  %754 = vmatpush1.msra.mxu0 0.0
  %755 = vmatprep.subr.mxu0 0.0
  %756 = vmatpush1.msra.mxu0 0.0
  %757 = vmatprep.subr.mxu0 0.0
  %758 = vmatpush1.msra.mxu0 0.0
  %759 = vmatprep.subr.mxu0 0.0
  %760 = vmatpush1.msra.mxu0 0.0
  %761 = vmatprep.subr.mxu0 0.0
  %762 = vmatpush1.msra.mxu0 0.0
  %763 = vmatprep.subr.mxu0 0.0
  %764 = vmatpush1.msra.mxu0 0.0
  %765 = vmatprep.subr.mxu0 %v652
  %766 = vmatpush1.msra.mxu0 %v651
  %767 = vmatprep.subr.mxu0 0.0
  %768 = vmatpush2.msra.mxu0 0.0
  %769 = vmatprep.subr.mxu0 0.0
  %770 = vmatpush2.msra.mxu0 0.0
  %771 = vmatprep.subr.mxu0 0.0
  %772 = vmatpush2.msra.mxu0 0.0
  %773 = vmatprep.subr.mxu0 0.0
  %774 = vmatpush2.msra.mxu0 0.0
  %775 = vmatprep.subr.mxu0 0.0
  %776 = vmatpush2.msra.mxu0 0.0
  %777 = vmatprep.subr.mxu0 0.0
  %778 = vmatpush2.msra.mxu0 0.0
  %779 = vmatprep.subr.mxu0 0.0
  %780 = vmatpush2.msra.mxu0 0.0
  %781 = vmatprep.subr.mxu0 0.0
  %782 = vmatpush2.msra.mxu0 0.0
  %783 = vmatprep.subr.mxu0 0.0
  %784 = vmatpush2.msra.mxu0 0.0
  %785 = vmatprep.subr.mxu0 0.0
  %786 = vmatpush2.msra.mxu0 0.0
  %787 = vmatprep.subr.mxu0 0.0
  %788 = vmatpush2.msra.mxu0 0.0
  %789 = vmatprep.subr.mxu0 0.0
  %790 = vmatpush2.msra.mxu0 0.0
  %791 = vmatprep.subr.mxu0 0.0
  %792 = vmatpush2.msra.mxu0 0.0
  %793 = vmatprep.subr.mxu0 0.0
  %794 = vmatpush2.msra.mxu0 0.0
  %795 = vmatprep.subr.mxu0 0.0
  %796 = vmatpush2.msra.mxu0 0.0
  %797 = vmatprep.subr.mxu0 0.0
  %798 = vmatpush2.msra.mxu0 0.0
  %799 = vmatprep.mubr.f32.mxu0 0.0
  %800 = vmatmul.mubr.f32.gmra.mxu0 %v662
  %v801 = vpop.f32.mrf.mxu0
  %v802 = vadd.f32 %v658, %v801
  %v803 = vpop.f32.mrf.mxu0
  %v804 = vadd.f32 %v658, %v803
  %805 = vdwg.mxu0
  %v806 = vtanh.pop %v731
  %v807 = vtanh.pop %v733
  %v808 = vtanh.pop %v802
  %v809 = vtanh.pop %v804
  %v810 = vld [vmem:[%s9] sm:$0xff]
  %v811 = vld [vmem:[%s10] sm:$0xff]
  %813 = vset.pattern.permute.xlu0 0
  %814 = vperm.xlu0 %813, %v811
  %v815 = vpop.permute.xlu0 %814
  %v818 = vsel %vm660, %v810, 0
  %820 = vmatprep.subr.mxu0 0.0
  %821 = vmatpush1.msra.mxu0 0.0
  %822 = vmatprep.subr.mxu0 0.0
  %823 = vmatpush1.msra.mxu0 0.0
  %824 = vmatprep.subr.mxu0 0.0
  %825 = vmatpush1.msra.mxu0 0.0
  %826 = vmatprep.subr.mxu0 0.0
  %827 = vmatpush1.msra.mxu0 0.0
  %828 = vmatprep.subr.mxu0 0.0
  %829 = vmatpush1.msra.mxu0 0.0
  %830 = vmatprep.subr.mxu0 0.0
  %831 = vmatpush1.msra.mxu0 0.0
  %832 = vmatprep.subr.mxu0 0.0
  %833 = vmatpush1.msra.mxu0 0.0
  %834 = vmatprep.subr.mxu0 0.0
  %835 = vmatpush1.msra.mxu0 0.0
  %836 = vmatprep.subr.mxu0 0.0
  %837 = vmatpush1.msra.mxu0 0.0
  %838 = vmatprep.subr.mxu0 0.0
  %839 = vmatpush1.msra.mxu0 0.0
  %840 = vmatprep.subr.mxu0 0.0
  %841 = vmatpush1.msra.mxu0 0.0
  %842 = vmatprep.subr.mxu0 0.0
  %843 = vmatpush1.msra.mxu0 0.0
  %844 = vmatprep.subr.mxu0 0.0
  %845 = vmatpush1.msra.mxu0 0.0
  %846 = vmatprep.subr.mxu0 0.0
  %847 = vmatpush1.msra.mxu0 0.0
  %848 = vmatprep.subr.mxu0 0.0
  %849 = vmatpush1.msra.mxu0 0.0
  %850 = vmatprep.subr.mxu0 %v807
  %851 = vmatpush1.msra.mxu0 %v806
  %852 = vmatprep.subr.mxu0 0.0
  %853 = vmatpush2.msra.mxu0 0.0
  %854 = vmatprep.subr.mxu0 0.0
  %855 = vmatpush2.msra.mxu0 0.0
  %856 = vmatprep.subr.mxu0 0.0
  %857 = vmatpush2.msra.mxu0 0.0
  %858 = vmatprep.subr.mxu0 0.0
  %859 = vmatpush2.msra.mxu0 0.0
  %860 = vmatprep.subr.mxu0 0.0
  %861 = vmatpush2.msra.mxu0 0.0
  %862 = vmatprep.subr.mxu0 0.0
  %863 = vmatpush2.msra.mxu0 0.0
  %864 = vmatprep.subr.mxu0 0.0
  %865 = vmatpush2.msra.mxu0 0.0
  %866 = vmatprep.subr.mxu0 0.0
  %867 = vmatpush2.msra.mxu0 0.0
  %868 = vmatprep.subr.mxu0 0.0
  %869 = vmatpush2.msra.mxu0 0.0
  %870 = vmatprep.subr.mxu0 0.0
  %871 = vmatpush2.msra.mxu0 0.0
  %872 = vmatprep.subr.mxu0 0.0
  %873 = vmatpush2.msra.mxu0 0.0
  %874 = vmatprep.subr.mxu0 0.0
  %875 = vmatpush2.msra.mxu0 0.0
  %876 = vmatprep.subr.mxu0 0.0
  %877 = vmatpush2.msra.mxu0 0.0
  %878 = vmatprep.subr.mxu0 0.0
  %879 = vmatpush2.msra.mxu0 0.0
  %880 = vmatprep.subr.mxu0 0.0
  %881 = vmatpush2.msra.mxu0 0.0
  %882 = vmatprep.subr.mxu0 0.0
  %883 = vmatpush2.msra.mxu0 0.0
  %884 = vmatprep.mubr.f32.mxu0 0.0
  %885 = vmatmul.mubr.f32.gmra.mxu0 %v818
  %v886 = vpop.f32.mrf.mxu0
  %v887 = vadd.f32 %v815, %v886
  %v888 = vpop.f32.mrf.mxu0
  %v889 = vadd.f32 %v815, %v888
  %890 = vdwg.mxu0
  %891 = vmatprep.subr.mxu0 0.0
  %892 = vmatpush1.msra.mxu0 0.0
  %893 = vmatprep.subr.mxu0 0.0
  %894 = vmatpush1.msra.mxu0 0.0
  %895 = vmatprep.subr.mxu0 0.0
  %896 = vmatpush1.msra.mxu0 0.0
  %897 = vmatprep.subr.mxu0 0.0
  %898 = vmatpush1.msra.mxu0 0.0
  %899 = vmatprep.subr.mxu0 0.0
  %900 = vmatpush1.msra.mxu0 0.0
  %901 = vmatprep.subr.mxu0 0.0
  %902 = vmatpush1.msra.mxu0 0.0
  %903 = vmatprep.subr.mxu0 0.0
  %904 = vmatpush1.msra.mxu0 0.0
  %905 = vmatprep.subr.mxu0 0.0
  %906 = vmatpush1.msra.mxu0 0.0
  %907 = vmatprep.subr.mxu0 0.0
  %908 = vmatpush1.msra.mxu0 0.0
  %909 = vmatprep.subr.mxu0 0.0
  %910 = vmatpush1.msra.mxu0 0.0
  %911 = vmatprep.subr.mxu0 0.0
  %912 = vmatpush1.msra.mxu0 0.0
  %913 = vmatprep.subr.mxu0 0.0
  %914 = vmatpush1.msra.mxu0 0.0
  %915 = vmatprep.subr.mxu0 0.0
  %916 = vmatpush1.msra.mxu0 0.0
  %917 = vmatprep.subr.mxu0 0.0
  %918 = vmatpush1.msra.mxu0 0.0
  %919 = vmatprep.subr.mxu0 0.0
  %920 = vmatpush1.msra.mxu0 0.0
  %921 = vmatprep.subr.mxu0 %v809
  %922 = vmatpush1.msra.mxu0 %v808
  %923 = vmatprep.subr.mxu0 0.0
  %924 = vmatpush2.msra.mxu0 0.0
  %925 = vmatprep.subr.mxu0 0.0
  %926 = vmatpush2.msra.mxu0 0.0
  %927 = vmatprep.subr.mxu0 0.0
  %928 = vmatpush2.msra.mxu0 0.0
  %929 = vmatprep.subr.mxu0 0.0
  %930 = vmatpush2.msra.mxu0 0.0
  %931 = vmatprep.subr.mxu0 0.0
  %932 = vmatpush2.msra.mxu0 0.0
  %933 = vmatprep.subr.mxu0 0.0
  %934 = vmatpush2.msra.mxu0 0.0
  %935 = vmatprep.subr.mxu0 0.0
  %936 = vmatpush2.msra.mxu0 0.0
  %937 = vmatprep.subr.mxu0 0.0
  %938 = vmatpush2.msra.mxu0 0.0
  %939 = vmatprep.subr.mxu0 0.0
  %940 = vmatpush2.msra.mxu0 0.0
  %941 = vmatprep.subr.mxu0 0.0
  %942 = vmatpush2.msra.mxu0 0.0
  %943 = vmatprep.subr.mxu0 0.0
  %944 = vmatpush2.msra.mxu0 0.0
  %945 = vmatprep.subr.mxu0 0.0
  %946 = vmatpush2.msra.mxu0 0.0
  %947 = vmatprep.subr.mxu0 0.0
  %948 = vmatpush2.msra.mxu0 0.0
  %949 = vmatprep.subr.mxu0 0.0
  %950 = vmatpush2.msra.mxu0 0.0
  %951 = vmatprep.subr.mxu0 0.0
  %952 = vmatpush2.msra.mxu0 0.0
  %953 = vmatprep.subr.mxu0 0.0
  %954 = vmatpush2.msra.mxu0 0.0
  %955 = vmatprep.mubr.f32.mxu0 0.0
  %956 = vmatmul.mubr.f32.gmra.mxu0 %v818
  %v957 = vpop.f32.mrf.mxu0
  %v958 = vadd.f32 %v815, %v957
  %v959 = vpop.f32.mrf.mxu0
  %v960 = vadd.f32 %v815, %v959
  %961 = vdwg.mxu0
  %v962 = vtanh.pop %v887
  %v963 = vtanh.pop %v889
  %v964 = vtanh.pop %v958
  %v965 = vtanh.pop %v960
  %v966 = vld [vmem:[%s11] sm:$0xff]
  %v967 = vld [vmem:[%s12] sm:$0xff]
  %969 = vset.pattern.permute.xlu0 0
  %970 = vperm.xlu0 %969, %v967
  %v971 = vpop.permute.xlu0 %970
  %v974 = vsel %vm660, %v966, 0
  %976 = vmatprep.subr.mxu0 0.0
  %977 = vmatpush1.msra.mxu0 0.0
  %978 = vmatprep.subr.mxu0 0.0
  %979 = vmatpush1.msra.mxu0 0.0
  %980 = vmatprep.subr.mxu0 0.0
  %981 = vmatpush1.msra.mxu0 0.0
  %982 = vmatprep.subr.mxu0 0.0
  %983 = vmatpush1.msra.mxu0 0.0
  %984 = vmatprep.subr.mxu0 0.0
  %985 = vmatpush1.msra.mxu0 0.0
  %986 = vmatprep.subr.mxu0 0.0
  %987 = vmatpush1.msra.mxu0 0.0
  %988 = vmatprep.subr.mxu0 0.0
  %989 = vmatpush1.msra.mxu0 0.0
  %990 = vmatprep.subr.mxu0 0.0
  %991 = vmatpush1.msra.mxu0 0.0
  %992 = vmatprep.subr.mxu0 0.0
  %993 = vmatpush1.msra.mxu0 0.0
  %994 = vmatprep.subr.mxu0 0.0
  %995 = vmatpush1.msra.mxu0 0.0
  %996 = vmatprep.subr.mxu0 0.0
  %997 = vmatpush1.msra.mxu0 0.0
  %998 = vmatprep.subr.mxu0 0.0
  %999 = vmatpush1.msra.mxu0 0.0
  %1000 = vmatprep.subr.mxu0 0.0
  %1001 = vmatpush1.msra.mxu0 0.0
  %1002 = vmatprep.subr.mxu0 0.0
  %1003 = vmatpush1.msra.mxu0 0.0
  %1004 = vmatprep.subr.mxu0 0.0
  %1005 = vmatpush1.msra.mxu0 0.0
  %1006 = vmatprep.subr.mxu0 %v963
  %1007 = vmatpush1.msra.mxu0 %v962
  %1008 = vmatprep.subr.mxu0 0.0
  %1009 = vmatpush2.msra.mxu0 0.0
  %1010 = vmatprep.subr.mxu0 0.0
  %1011 = vmatpush2.msra.mxu0 0.0
  %1012 = vmatprep.subr.mxu0 0.0
  %1013 = vmatpush2.msra.mxu0 0.0
  %1014 = vmatprep.subr.mxu0 0.0
  %1015 = vmatpush2.msra.mxu0 0.0
  %1016 = vmatprep.subr.mxu0 0.0
  %1017 = vmatpush2.msra.mxu0 0.0
  %1018 = vmatprep.subr.mxu0 0.0
  %1019 = vmatpush2.msra.mxu0 0.0
  %1020 = vmatprep.subr.mxu0 0.0
  %1021 = vmatpush2.msra.mxu0 0.0
  %1022 = vmatprep.subr.mxu0 0.0
  %1023 = vmatpush2.msra.mxu0 0.0
  %1024 = vmatprep.subr.mxu0 0.0
  %1025 = vmatpush2.msra.mxu0 0.0
  %1026 = vmatprep.subr.mxu0 0.0
  %1027 = vmatpush2.msra.mxu0 0.0
  %1028 = vmatprep.subr.mxu0 0.0
  %1029 = vmatpush2.msra.mxu0 0.0
  %1030 = vmatprep.subr.mxu0 0.0
  %1031 = vmatpush2.msra.mxu0 0.0
  %1032 = vmatprep.subr.mxu0 0.0
  %1033 = vmatpush2.msra.mxu0 0.0
  %1034 = vmatprep.subr.mxu0 0.0
  %1035 = vmatpush2.msra.mxu0 0.0
  %1036 = vmatprep.subr.mxu0 0.0
  %1037 = vmatpush2.msra.mxu0 0.0
  %1038 = vmatprep.subr.mxu0 0.0
  %1039 = vmatpush2.msra.mxu0 0.0
  %1040 = vmatprep.mubr.f32.mxu0 0.0
  %1041 = vmatmul.mubr.f32.gmra.mxu0 %v974
  %v1042 = vpop.f32.mrf.mxu0
  %v1043 = vadd.f32 %v971, %v1042
  %v1044 = vpop.f32.mrf.mxu0
  %v1045 = vadd.f32 %v971, %v1044
  %1046 = vdwg.mxu0
  %1047 = vmatprep.subr.mxu0 0.0
  %1048 = vmatpush1.msra.mxu0 0.0
  %1049 = vmatprep.subr.mxu0 0.0
  %1050 = vmatpush1.msra.mxu0 0.0
  %1051 = vmatprep.subr.mxu0 0.0
  %1052 = vmatpush1.msra.mxu0 0.0
  %1053 = vmatprep.subr.mxu0 0.0
  %1054 = vmatpush1.msra.mxu0 0.0
  %1055 = vmatprep.subr.mxu0 0.0
  %1056 = vmatpush1.msra.mxu0 0.0
  %1057 = vmatprep.subr.mxu0 0.0
  %1058 = vmatpush1.msra.mxu0 0.0
  %1059 = vmatprep.subr.mxu0 0.0
  %1060 = vmatpush1.msra.mxu0 0.0
  %1061 = vmatprep.subr.mxu0 0.0
  %1062 = vmatpush1.msra.mxu0 0.0
  %1063 = vmatprep.subr.mxu0 0.0
  %1064 = vmatpush1.msra.mxu0 0.0
  %1065 = vmatprep.subr.mxu0 0.0
  %1066 = vmatpush1.msra.mxu0 0.0
  %1067 = vmatprep.subr.mxu0 0.0
  %1068 = vmatpush1.msra.mxu0 0.0
  %1069 = vmatprep.subr.mxu0 0.0
  %1070 = vmatpush1.msra.mxu0 0.0
  %1071 = vmatprep.subr.mxu0 0.0
  %1072 = vmatpush1.msra.mxu0 0.0
  %1073 = vmatprep.subr.mxu0 0.0
  %1074 = vmatpush1.msra.mxu0 0.0
  %1075 = vmatprep.subr.mxu0 0.0
  %1076 = vmatpush1.msra.mxu0 0.0
  %1077 = vmatprep.subr.mxu0 %v965
  %1078 = vmatpush1.msra.mxu0 %v964
  %1079 = vmatprep.subr.mxu0 0.0
  %1080 = vmatpush2.msra.mxu0 0.0
  %1081 = vmatprep.subr.mxu0 0.0
  %1082 = vmatpush2.msra.mxu0 0.0
  %1083 = vmatprep.subr.mxu0 0.0
  %1084 = vmatpush2.msra.mxu0 0.0
  %1085 = vmatprep.subr.mxu0 0.0
  %1086 = vmatpush2.msra.mxu0 0.0
  %1087 = vmatprep.subr.mxu0 0.0
  %1088 = vmatpush2.msra.mxu0 0.0
  %1089 = vmatprep.subr.mxu0 0.0
  %1090 = vmatpush2.msra.mxu0 0.0
  %1091 = vmatprep.subr.mxu0 0.0
  %1092 = vmatpush2.msra.mxu0 0.0
  %1093 = vmatprep.subr.mxu0 0.0
  %1094 = vmatpush2.msra.mxu0 0.0
  %1095 = vmatprep.subr.mxu0 0.0
  %1096 = vmatpush2.msra.mxu0 0.0
  %1097 = vmatprep.subr.mxu0 0.0
  %1098 = vmatpush2.msra.mxu0 0.0
  %1099 = vmatprep.subr.mxu0 0.0
  %1100 = vmatpush2.msra.mxu0 0.0
  %1101 = vmatprep.subr.mxu0 0.0
  %1102 = vmatpush2.msra.mxu0 0.0
  %1103 = vmatprep.subr.mxu0 0.0
  %1104 = vmatpush2.msra.mxu0 0.0
  %1105 = vmatprep.subr.mxu0 0.0
  %1106 = vmatpush2.msra.mxu0 0.0
  %1107 = vmatprep.subr.mxu0 0.0
  %1108 = vmatpush2.msra.mxu0 0.0
  %1109 = vmatprep.subr.mxu0 0.0
  %1110 = vmatpush2.msra.mxu0 0.0
  %1111 = vmatprep.mubr.f32.mxu0 0.0
  %1112 = vmatmul.mubr.f32.gmra.mxu0 %v974
  %v1113 = vpop.f32.mrf.mxu0
  %v1114 = vadd.f32 %v971, %v1113
  %v1115 = vpop.f32.mrf.mxu0
  %v1116 = vadd.f32 %v971, %v1115
  %1117 = vdwg.mxu0
  %v1118 = vtanh.pop %v1043
  %v1119 = vtanh.pop %v1045
  %v1120 = vtanh.pop %v1114
  %v1121 = vtanh.pop %v1116
  %v1122 = vld [vmem:[%s13] sm:$0x7f]
  %v1123 = vld [vmem:[%s14] sm:$0x7f]
  %1125 = vset.pattern.permute.xlu0 0
  %1126 = vperm.xlu0 %1125, %v1123
  %v1127 = vpop.permute.xlu0 %1126
  %v1130 = vsel %vm660, %v1122, 0
  %1132 = vmatprep.subr.mxu0 0.0
  %1133 = vmatpush1.msra.mxu0 0.0
  %1134 = vmatprep.subr.mxu0 0.0
  %1135 = vmatpush1.msra.mxu0 0.0
  %1136 = vmatprep.subr.mxu0 0.0
  %1137 = vmatpush1.msra.mxu0 0.0
  %1138 = vmatprep.subr.mxu0 0.0
  %1139 = vmatpush1.msra.mxu0 0.0
  %1140 = vmatprep.subr.mxu0 0.0
  %1141 = vmatpush1.msra.mxu0 0.0
  %1142 = vmatprep.subr.mxu0 0.0
  %1143 = vmatpush1.msra.mxu0 0.0
  %1144 = vmatprep.subr.mxu0 0.0
  %1145 = vmatpush1.msra.mxu0 0.0
  %1146 = vmatprep.subr.mxu0 0.0
  %1147 = vmatpush1.msra.mxu0 0.0
  %1148 = vmatprep.subr.mxu0 0.0
  %1149 = vmatpush1.msra.mxu0 0.0
  %1150 = vmatprep.subr.mxu0 0.0
  %1151 = vmatpush1.msra.mxu0 0.0
  %1152 = vmatprep.subr.mxu0 0.0
  %1153 = vmatpush1.msra.mxu0 0.0
  %1154 = vmatprep.subr.mxu0 0.0
  %1155 = vmatpush1.msra.mxu0 0.0
  %1156 = vmatprep.subr.mxu0 0.0
  %1157 = vmatpush1.msra.mxu0 0.0
  %1158 = vmatprep.subr.mxu0 0.0
  %1159 = vmatpush1.msra.mxu0 0.0
  %1160 = vmatprep.subr.mxu0 0.0
  %1161 = vmatpush1.msra.mxu0 0.0
  %1162 = vmatprep.subr.mxu0 %v1119
  %1163 = vmatpush1.msra.mxu0 %v1118
  %1164 = vmatprep.subr.mxu0 0.0
  %1165 = vmatpush2.msra.mxu0 0.0
  %1166 = vmatprep.subr.mxu0 0.0
  %1167 = vmatpush2.msra.mxu0 0.0
  %1168 = vmatprep.subr.mxu0 0.0
  %1169 = vmatpush2.msra.mxu0 0.0
  %1170 = vmatprep.subr.mxu0 0.0
  %1171 = vmatpush2.msra.mxu0 0.0
  %1172 = vmatprep.subr.mxu0 0.0
  %1173 = vmatpush2.msra.mxu0 0.0
  %1174 = vmatprep.subr.mxu0 0.0
  %1175 = vmatpush2.msra.mxu0 0.0
  %1176 = vmatprep.subr.mxu0 0.0
  %1177 = vmatpush2.msra.mxu0 0.0
  %1178 = vmatprep.subr.mxu0 0.0
  %1179 = vmatpush2.msra.mxu0 0.0
  %1180 = vmatprep.subr.mxu0 0.0
  %1181 = vmatpush2.msra.mxu0 0.0
  %1182 = vmatprep.subr.mxu0 0.0
  %1183 = vmatpush2.msra.mxu0 0.0
  %1184 = vmatprep.subr.mxu0 0.0
  %1185 = vmatpush2.msra.mxu0 0.0
  %1186 = vmatprep.subr.mxu0 0.0
  %1187 = vmatpush2.msra.mxu0 0.0
  %1188 = vmatprep.subr.mxu0 0.0
  %1189 = vmatpush2.msra.mxu0 0.0
  %1190 = vmatprep.subr.mxu0 0.0
  %1191 = vmatpush2.msra.mxu0 0.0
  %1192 = vmatprep.subr.mxu0 0.0
  %1193 = vmatpush2.msra.mxu0 0.0
  %1194 = vmatprep.subr.mxu0 0.0
  %1195 = vmatpush2.msra.mxu0 0.0
  %1196 = vmatprep.mubr.f32.mxu0 0.0
  %1197 = vmatmul.mubr.f32.gmra.mxu0 %v1130
  %v1198 = vpop.f32.mrf.mxu0
  %v1199 = vadd.f32 %v1127, %v1198
  %v1200 = vpop.f32.mrf.mxu0
  %v1201 = vadd.f32 %v1127, %v1200
  %1202 = vdwg.mxu0
  %1203 = vmatprep.subr.mxu0 0.0
  %1204 = vmatpush1.msra.mxu0 0.0
  %1205 = vmatprep.subr.mxu0 0.0
  %1206 = vmatpush1.msra.mxu0 0.0
  %1207 = vmatprep.subr.mxu0 0.0
  %1208 = vmatpush1.msra.mxu0 0.0
  %1209 = vmatprep.subr.mxu0 0.0
  %1210 = vmatpush1.msra.mxu0 0.0
  %1211 = vmatprep.subr.mxu0 0.0
  %1212 = vmatpush1.msra.mxu0 0.0
  %1213 = vmatprep.subr.mxu0 0.0
  %1214 = vmatpush1.msra.mxu0 0.0
  %1215 = vmatprep.subr.mxu0 0.0
  %1216 = vmatpush1.msra.mxu0 0.0
  %1217 = vmatprep.subr.mxu0 0.0
  %1218 = vmatpush1.msra.mxu0 0.0
  %1219 = vmatprep.subr.mxu0 0.0
  %1220 = vmatpush1.msra.mxu0 0.0
  %1221 = vmatprep.subr.mxu0 0.0
  %1222 = vmatpush1.msra.mxu0 0.0
  %1223 = vmatprep.subr.mxu0 0.0
  %1224 = vmatpush1.msra.mxu0 0.0
  %1225 = vmatprep.subr.mxu0 0.0
  %1226 = vmatpush1.msra.mxu0 0.0
  %1227 = vmatprep.subr.mxu0 0.0
  %1228 = vmatpush1.msra.mxu0 0.0
  %1229 = vmatprep.subr.mxu0 0.0
  %1230 = vmatpush1.msra.mxu0 0.0
  %1231 = vmatprep.subr.mxu0 0.0
  %1232 = vmatpush1.msra.mxu0 0.0
  %1233 = vmatprep.subr.mxu0 %v1121
  %1234 = vmatpush1.msra.mxu0 %v1120
  %1235 = vmatprep.subr.mxu0 0.0
  %1236 = vmatpush2.msra.mxu0 0.0
  %1237 = vmatprep.subr.mxu0 0.0
  %1238 = vmatpush2.msra.mxu0 0.0
  %1239 = vmatprep.subr.mxu0 0.0
  %1240 = vmatpush2.msra.mxu0 0.0
  %1241 = vmatprep.subr.mxu0 0.0
  %1242 = vmatpush2.msra.mxu0 0.0
  %1243 = vmatprep.subr.mxu0 0.0
  %1244 = vmatpush2.msra.mxu0 0.0
  %1245 = vmatprep.subr.mxu0 0.0
  %1246 = vmatpush2.msra.mxu0 0.0
  %1247 = vmatprep.subr.mxu0 0.0
  %1248 = vmatpush2.msra.mxu0 0.0
  %1249 = vmatprep.subr.mxu0 0.0
  %1250 = vmatpush2.msra.mxu0 0.0
  %1251 = vmatprep.subr.mxu0 0.0
  %1252 = vmatpush2.msra.mxu0 0.0
  %1253 = vmatprep.subr.mxu0 0.0
  %1254 = vmatpush2.msra.mxu0 0.0
  %1255 = vmatprep.subr.mxu0 0.0
  %1256 = vmatpush2.msra.mxu0 0.0
  %1257 = vmatprep.subr.mxu0 0.0
  %1258 = vmatpush2.msra.mxu0 0.0
  %1259 = vmatprep.subr.mxu0 0.0
  %1260 = vmatpush2.msra.mxu0 0.0
  %1261 = vmatprep.subr.mxu0 0.0
  %1262 = vmatpush2.msra.mxu0 0.0
  %1263 = vmatprep.subr.mxu0 0.0
  %1264 = vmatpush2.msra.mxu0 0.0
  %1265 = vmatprep.subr.mxu0 0.0
  %1266 = vmatpush2.msra.mxu0 0.0
  %1267 = vmatprep.mubr.f32.mxu0 0.0
  %1268 = vmatmul.mubr.f32.gmra.mxu0 %v1130
  %v1269 = vpop.f32.mrf.mxu0
  %v1270 = vadd.f32 %v1127, %v1269
  %v1271 = vpop.f32.mrf.mxu0
  %v1272 = vadd.f32 %v1127, %v1271
  %1273 = vdwg.mxu0
  %1274 = vst [vmem:[%s15] sm:$0x7f] %v1199
  %1275 = vst [vmem:[%s15 + $0x8] sm:$0x7f] %v1201
  %1276 = vst [vmem:[%s15 + $0x10] sm:$0x7f] %v1270
  %1277 = vst [vmem:[%s15 + $0x18] sm:$0x7f] %v1272
  // Predicated region
  $region62: #{net_forward.1} parent=0 // pred_check
    _
  $region63: #{net_forward.1} parent=0 // pred_check_branch
    %1279 = sbr.rel (0) target = $region65
  $region64: #{net_forward.1} parent=0 // pred_region
    _
  $region65: #{net_forward.1} parent=0 // pred_fallthru
    _
  // Predicated region
  $region66: #{net_forward.1} parent=0 // pred_check
    _
  $region67: #{net_forward.1} parent=0 // pred_check_branch
    %1281 = sbr.rel (0) target = $region69
  $region68: #{net_forward.1} parent=0 // pred_region
    _
  $region69: #{net_forward.1} parent=0 // pred_fallthru
    _

</llo_original>
